<compile_context>
chip_gen: v7x
topology: tpu7x:2x2x1
jax: 0.10.0
libtpu: 0.0.40
codegen_flags: <defaults>
</compile_context>

<pallas_src>
import numpy as np
import jax
import jax.numpy as jnp
from jax import lax
from jax.experimental import pallas as pl
from jax.experimental.pallas import tpu as pltpu

_LANE = 128
_TARGET_BLOCK_BYTES = 4 << 20      # ~4 MiB block -> ~8 MiB HBM traffic per grid step
_MIN_SPLIT_BLOCK_BYTES = 1 << 20   # never shrink blocks below ~1 MiB for TC balance
_VMEM_LIMIT_BYTES = 32 << 20       # > v5e's 16 MiB default, <= v7x physical VMEM
_TILE_K = 512                      # targets: lanes per grid step (bounded VMEM)


# ----------------------------- tiling helpers --------------------------------

def _sublane_pack(dtype):
    # rows per vreg: f32 -> 8, bf16/f16 -> 16, int8/fp8 -> 32
    return max(8, 32 // jnp.dtype(dtype).itemsize)


def _pick_tile_r(R, B, dtype):
    itemsize = jnp.dtype(dtype).itemsize
    bytes_per_row = B * _LANE * itemsize
    row_mult = _sublane_pack(dtype)
    tile = (_TARGET_BLOCK_BYTES // bytes_per_row) // row_mult * row_mult
    tile = max(row_mult, tile)
    if tile >= R:
        tile = R
    steps = -(-R // tile)
    if steps < 4:
        # v7x: two TensorCores split the ("parallel",) grid; prefer >= 4 balanced
        # steps as long as each block stays >= ~1 MiB (keeps v5e/v6e at roofline).
        q = -(-R // 4)
        q = -(-q // row_mult) * row_mult
        if q < R and q * bytes_per_row >= _MIN_SPLIT_BLOCK_BYTES:
            tile = q
    return tile


# ----------------------------- kernels ----------------------------------------

def _superpose_x_kernel(shift_ref, lam_ref, x_ref, o_ref):
    # One row-tile of every batch element; the batch roll is done entirely in VMEM
    # (single HBM read of x + single HBM write of the output).
    B = x_ref.shape[0]
    shift = shift_ref[0]

    def body(b, carry):
        src = (b + (B - shift)) % B                  # == shuffle_idx[b]
        lam = lam_ref[b].astype(x_ref.dtype)         # 0 or 1
        o_ref[b] = (x_ref[b] + lam * x_ref[src]).astype(o_ref.dtype)
        return carry

    lax.fori_loop(0, B, body, 0)


def _superpose_targets_kernel(shift_ref, lam_ref, t_ref, o_ref, dbl_ref):
    # One class-tile, whole batch in VMEM.  targets[shuffle_idx] == roll(t, shift, 0);
    # realize the roll by writing t twice into a (2B, tile_k) scratch and reading a
    # dynamic window of B rows starting at (B - shift).
    t = t_ref[...]
    B = t.shape[0]
    dbl_ref[pl.ds(0, B), :] = t
    dbl_ref[pl.ds(B, B), :] = t
    shift = shift_ref[0]
    ts = dbl_ref[pl.ds(B - shift, B), :]
    lam = lam_ref[...]                               # (B, 1) broadcasts along lanes
    o_ref[...] = (t + lam * (1.0 - t) * ts).astype(o_ref.dtype)


# ----------------------------- wrappers ---------------------------------------

def superpose_x(x, shift, lambda_):
    """x: (B, ...) float; shift: traced int scalar in [1, B-1]; lambda_: (B,) 0/1."""
    B = x.shape[0]
    n = int(np.prod(x.shape[1:]))
    Ln = pl.cdiv(n, _LANE) * _LANE
    xf = x.reshape(B, n)
    if Ln != n:
        # TODO(synk): only triggers when the feature count is not a multiple of 128
        # lanes; costs one extra XLA pad + slice pass over x.
        xf = jnp.pad(xf, ((0, 0), (0, Ln - n)))
    R = Ln // _LANE
    x3 = xf.reshape(B, R, _LANE)

    tile_r = _pick_tile_r(R, B, x.dtype)
    grid = (pl.cdiv(R, tile_r),)

    shift_arr = jnp.reshape(shift, (1,)).astype(jnp.int32)
    lam_arr = lambda_.astype(jnp.int32).reshape(B)

    def idx_map(i, shift_s, lam_s):
        return (0, i, 0)

    grid_spec = pltpu.PrefetchScalarGridSpec(
        num_scalar_prefetch=2,
        grid=grid,
        in_specs=[pl.BlockSpec((B, tile_r, _LANE), idx_map)],
        out_specs=pl.BlockSpec((B, tile_r, _LANE), idx_map),
    )
    itemsize = jnp.dtype(x.dtype).itemsize
    out = pl.pallas_call(
        _superpose_x_kernel,
        out_shape=jax.ShapeDtypeStruct((B, R, _LANE), x.dtype),
        grid_spec=grid_spec,
        compiler_params=pltpu.CompilerParams(
            dimension_semantics=("parallel",),
            vmem_limit_bytes=_VMEM_LIMIT_BYTES),
        cost_estimate=pl.CostEstimate(
            flops=2 * B * Ln,
            transcendentals=0,
            bytes_accessed=2 * B * Ln * itemsize),   # 1 read + 1 write
    )(shift_arr, lam_arr, x3)

    out = out.reshape(B, Ln)
    if Ln != n:
        out = out[:, :n]
    return out.reshape(x.shape)


def superpose_targets(targets, shift, lambda_):
    """targets: (B, K) multi-hot labels; shift: traced int scalar; lambda_: (B,)."""
    B, K = targets.shape
    Kp = pl.cdiv(K, _LANE) * _LANE
    tp = jnp.pad(targets, ((0, 0), (0, Kp - K))) if Kp != K else targets
    lam2 = lambda_.reshape(B, 1).astype(targets.dtype)
    shift_arr = jnp.reshape(shift, (1,)).astype(jnp.int32)

    tile_k = min(Kp, _TILE_K)
    grid = (pl.cdiv(Kp, tile_k),)

    grid_spec = pltpu.PrefetchScalarGridSpec(
        num_scalar_prefetch=1,
        grid=grid,
        in_specs=[
            pl.BlockSpec((B, 1), lambda i, s: (0, 0)),
            pl.BlockSpec((B, tile_k), lambda i, s: (0, i)),
        ],
        out_specs=pl.BlockSpec((B, tile_k), lambda i, s: (0, i)),
        scratch_shapes=[pltpu.VMEM((2 * B, tile_k), targets.dtype)],
    )
    out = pl.pallas_call(
        _superpose_targets_kernel,
        out_shape=jax.ShapeDtypeStruct((B, Kp), targets.dtype),
        grid_spec=grid_spec,
        compiler_params=pltpu.CompilerParams(
            dimension_semantics=("parallel",)),
    )(shift_arr, lam2, tp)
    return out[:, :K] if Kp != K else out


def draw_superpose_params(key, batch_size, p):
    """shift ~ U{1,...,B-1}, lambda ~ Bernoulli(p); mirrors the numpy reference."""
    k_shift, k_lam = jax.random.split(key)
    shift = jax.random.randint(k_shift, (), 1, batch_size, dtype=jnp.int32)
    lambda_ = jax.random.bernoulli(k_lam, p, (batch_size,)).astype(jnp.float32)
    return shift, lambda_


def superpose_forward(x, targets, seq_len, *, p, key, training=True, scale_fn=None):
    """Full Superpose.forward; returns (x, targets, seq_len) like the reference."""
    if not training:
        return x, targets, seq_len

    B = x.shape[0]
    shift, lambda_ = draw_superpose_params(key, B, p)
    shuffle_idx = jnp.roll(jnp.arange(B, dtype=jnp.int32), shift)

    if seq_len is not None:
        seq_len = jnp.asarray(seq_len)
        seq_len = jnp.maximum(
            seq_len,
            (lambda_ > 0.0).astype(seq_len.dtype) * seq_len[shuffle_idx])

    if scale_fn is not None:
        # TODO(synk): scale_fn is an arbitrary user callable; applied in plain JAX
        # (equivalent to the reference as long as it acts per batch element).
        x = scale_fn(x)

    x = superpose_x(x, shift, lambda_)

    if isinstance(targets, (list, tuple)):
        targets = [superpose_targets(t, shift, lambda_) for t in targets]
    elif targets is not None:
        targets = superpose_targets(targets, shift, lambda_)

    return x, targets, seq_len


# ----------------------------- main --------------------------------------------

if __name__ == "__main__":
    key = jax.random.PRNGKey(0)
    k_x, k_t, k_fwd = jax.random.split(key, 3)

    B, C, T, F = 4, 4, 16, 24    # C*T*F = 1536 = 12 * 128 lanes -> no pad/slice pass
    K = 8                        # number of target classes (multi-hot)
    p = 0.5

    x = jax.random.normal(k_x, (B, C, T, F), dtype=jnp.float32)
    targets = (jax.random.uniform(k_t, (B, K)) > 0.5).astype(jnp.float32)
    seq_len = jnp.array([3, 7, 12, 16], dtype=jnp.int32)

    fwd = jax.jit(lambda xx, tt, sl, kk: superpose_forward(
        xx, tt, sl, p=p, key=kk, training=True))
    x_out, t_out, sl_out = fwd(x, targets, seq_len, k_fwd)

    jax.block_until_ready(x_out)
    jax.block_until_ready(t_out)
    jax.block_until_ready(sl_out)

    # Cross-check against a plain-numpy reference of the same math (same key path,
    # so identical randomness as inside the jitted forward).
    shift, lambda_ = draw_superpose_params(k_fwd, B, p)
    shift_np = int(shift)
    shuffle_idx_np = np.roll(np.arange(B), shift_np)
    lambda_np = np.asarray(lambda_)
    x_np = np.asarray(x)
    t_np = np.asarray(targets)
    sl_np = np.asarray(seq_len)

    x_ref = x_np + lambda_np[:, None, None, None] * x_np[shuffle_idx_np]
    t_ref = t_np + lambda_np[:, None] * (1.0 - t_np) * t_np[shuffle_idx_np]
    sl_ref = np.maximum(
        sl_np, (lambda_np > 0).astype(sl_np.dtype) * sl_np[shuffle_idx_np])

    assert np.allclose(np.asarray(x_out), x_ref, atol=1e-6)
    assert np.allclose(np.asarray(t_out), t_ref, atol=1e-6)
    assert np.array_equal(np.asarray(sl_out), sl_ref)

    print("KERNEL_OK")
</pallas_src>

<mosaic_0001>
module attributes {stable_mosaic.version = 11 : i64} {
  func.func @_superpose_x_kernel(%arg0: i32, %arg1: memref<1xi32, #tpu.memory_space<smem>>, %arg2: memref<4xi32, #tpu.memory_space<smem>>, %arg3: memref<4x12x128xf32, #tpu.memory_space<vmem>>, %arg4: memref<4x12x128xf32, #tpu.memory_space<vmem>>) attributes {dimension_semantics = [#tpu.dimension_semantics<parallel>], iteration_bounds = array<i64: 1>, scalar_prefetch = 2 : i64, scratch_operands = 0 : i64, tpu.core_type = #tpu.core_type<tc>, window_params = [{transform_indices = @transform_0, window_bounds = array<i64: 4, 12, 128>}, {transform_indices = @transform_1, window_bounds = array<i64: 4, 12, 128>}]} {
    %c0 = arith.constant 0 : index
    %0 = memref.load %arg1[%c0] : memref<1xi32, #tpu.memory_space<smem>>
    %c0_i32 = arith.constant 0 : i32
    %c4_i32 = arith.constant 4 : i32
    %1 = arith.addi %c0_i32, %c4_i32 : i32
    %c1_i32 = arith.constant 1 : i32
    scf.for %arg5 = %c0_i32 to %1 step %c1_i32  : i32 {
      %c4_i32_1 = arith.constant 4 : i32
      %2 = arith.subi %c4_i32_1, %0 : i32
      %3 = arith.addi %arg5, %2 : i32
      %c4_i32_2 = arith.constant 4 : i32
      %c0_i32_3 = arith.constant 0 : i32
      %4 = arith.cmpi eq, %c4_i32_2, %c0_i32_3 : i32
      %c1_i32_4 = arith.constant 1 : i32
      %5 = arith.select %4, %c1_i32_4, %c4_i32_2 : i32
      %6 = arith.remsi %3, %5 : i32
      %c0_i32_5 = arith.constant 0 : i32
      %7 = arith.cmpi ne, %6, %c0_i32_5 : i32
      %c0_i32_6 = arith.constant 0 : i32
      %8 = arith.cmpi slt, %6, %c0_i32_6 : i32
      %c0_i32_7 = arith.constant 0 : i32
      %9 = arith.cmpi slt, %5, %c0_i32_7 : i32
      %10 = arith.xori %8, %9 : i1
      %11 = arith.andi %10, %7 : i1
      %12 = arith.addi %6, %5 : i32
      %13 = arith.select %11, %12, %6 : i32
      %14 = arith.index_cast %arg5 : i32 to index
      %15 = memref.load %arg2[%14] : memref<4xi32, #tpu.memory_space<smem>>
      %16 = arith.sitofp %15 : i32 to f32
      %17 = arith.index_cast %arg5 : i32 to index
      %c0_8 = arith.constant 0 : index
      %c0_9 = arith.constant 0 : index
      %18 = vector.load %arg3[%17, %c0_8, %c0_9] : memref<4x12x128xf32, #tpu.memory_space<vmem>>, vector<1x12x128xf32>
      %19 = vector.shape_cast %18 : vector<1x12x128xf32> to vector<12x128xf32>
      %20 = arith.index_cast %13 : i32 to index
      %c0_10 = arith.constant 0 : index
      %c0_11 = arith.constant 0 : index
      %21 = vector.load %arg3[%20, %c0_10, %c0_11] : memref<4x12x128xf32, #tpu.memory_space<vmem>>, vector<1x12x128xf32>
      %22 = vector.shape_cast %21 : vector<1x12x128xf32> to vector<12x128xf32>
      %23 = vector.broadcast %16 : f32 to vector<12x128xf32>
      %24 = arith.mulf %23, %22 : vector<12x128xf32>
      %25 = arith.addf %19, %24 : vector<12x128xf32>
      %26 = arith.index_cast %arg5 : i32 to index
      %c0_12 = arith.constant 0 : index
      %c0_13 = arith.constant 0 : index
      %27 = vector.load %arg4[%26, %c0_12, %c0_13] : memref<4x12x128xf32, #tpu.memory_space<vmem>>, vector<1x12x128xf32>
      %28 = vector.shape_cast %27 : vector<1x12x128xf32> to vector<12x128xf32>
      %29 = vector.shape_cast %25 : vector<12x128xf32> to vector<1x12x128xf32>
      tpu.vector_store %arg4[%26, %c0_12, %c0_13], %29 {strides = array<i32>} : memref<4x12x128xf32, #tpu.memory_space<vmem>>, vector<1x12x128xf32>,
    }
    %c4_i32_0 = arith.constant 4 : i32
    return
  }
  func.func @transform_0(%arg0: i32, %arg1: memref<1xi32, #tpu.memory_space<smem>>, %arg2: memref<4xi32, #tpu.memory_space<smem>>) -> (i32, i32, i32) {
    %c0_i32 = arith.constant 0 : i32
    %c0_i32_0 = arith.constant 0 : i32
    %c0_i32_1 = arith.constant 0 : i32
    return %c0_i32, %arg0, %c0_i32_0 : i32, i32, i32
  }
  func.func @transform_1(%arg0: i32, %arg1: memref<1xi32, #tpu.memory_space<smem>>, %arg2: memref<4xi32, #tpu.memory_space<smem>>) -> (i32, i32, i32) {
    %c0_i32 = arith.constant 0 : i32
    %c0_i32_0 = arith.constant 0 : i32
    %c0_i32_1 = arith.constant 0 : i32
    return %c0_i32, %arg0, %c0_i32_0 : i32, i32, i32
  }
}

module attributes {stable_mosaic.version = 11 : i64} {
  func.func @_superpose_targets_kernel(%arg0: i32, %arg1: memref<1xi32, #tpu.memory_space<smem>>, %arg2: memref<4x1xf32, #tpu.memory_space<vmem>>, %arg3: memref<4x128xf32, #tpu.memory_space<vmem>>, %arg4: memref<4x128xf32, #tpu.memory_space<vmem>>, %arg5: memref<8x128xf32, #tpu.memory_space<vmem>>) attributes {dimension_semantics = [#tpu.dimension_semantics<parallel>], iteration_bounds = array<i64: 1>, scalar_prefetch = 1 : i64, scratch_operands = 1 : i64, tpu.core_type = #tpu.core_type<tc>, window_params = [{pipeline_mode = #tpu.pipeline_mode<synchronous>, transform_indices = @transform_0, window_bounds = array<i64: 4, 1>}, {transform_indices = @transform_1, window_bounds = array<i64: 4, 128>}, {transform_indices = @transform_2, window_bounds = array<i64: 4, 128>}]} {
    %c0 = arith.constant 0 : index
    %c0_0 = arith.constant 0 : index
    %0 = vector.load %arg3[%c0, %c0_0] : memref<4x128xf32, #tpu.memory_space<vmem>>, vector<4x128xf32>
    %c0_1 = arith.constant 0 : index
    %c0_2 = arith.constant 0 : index
    %1 = vector.load %arg5[%c0_1, %c0_2] : memref<8x128xf32, #tpu.memory_space<vmem>>, vector<4x128xf32>
    tpu.vector_store %arg5[%c0_1, %c0_2], %0 {strides = array<i32>} : memref<8x128xf32, #tpu.memory_space<vmem>>, vector<4x128xf32>,
    %c4 = arith.constant 4 : index
    %c0_3 = arith.constant 0 : index
    %2 = vector.load %arg5[%c4, %c0_3] : memref<8x128xf32, #tpu.memory_space<vmem>>, vector<4x128xf32>
    tpu.vector_store %arg5[%c4, %c0_3], %0 {strides = array<i32>} : memref<8x128xf32, #tpu.memory_space<vmem>>, vector<4x128xf32>,
    %c0_4 = arith.constant 0 : index
    %3 = memref.load %arg1[%c0_4] : memref<1xi32, #tpu.memory_space<smem>>
    %c4_i32 = arith.constant 4 : i32
    %4 = arith.subi %c4_i32, %3 : i32
    %5 = arith.index_cast %4 : i32 to index
    %c0_5 = arith.constant 0 : index
    %6 = vector.load %arg5[%5, %c0_5] : memref<8x128xf32, #tpu.memory_space<vmem>>, vector<4x128xf32>
    %c0_6 = arith.constant 0 : index
    %c0_7 = arith.constant 0 : index
    %7 = vector.load %arg2[%c0_6, %c0_7] : memref<4x1xf32, #tpu.memory_space<vmem>>, vector<4x1xf32>
    %cst = arith.constant 1.000000e+00 : f32
    %8 = vector.broadcast %cst : f32 to vector<4x128xf32>
    %9 = arith.subf %8, %0 : vector<4x128xf32>
    %10 = vector.broadcast %7 : vector<4x1xf32> to vector<4x128xf32>
    %11 = arith.mulf %10, %9 : vector<4x128xf32>
    %12 = arith.mulf %11, %6 : vector<4x128xf32>
    %13 = arith.addf %0, %12 : vector<4x128xf32>
    %c0_8 = arith.constant 0 : index
    %c0_9 = arith.constant 0 : index
    %14 = vector.load %arg4[%c0_8, %c0_9] : memref<4x128xf32, #tpu.memory_space<vmem>>, vector<4x128xf32>
    tpu.vector_store %arg4[%c0_8, %c0_9], %13 {strides = array<i32>} : memref<4x128xf32, #tpu.memory_space<vmem>>, vector<4x128xf32>,
    return
  }
  func.func @transform_0(%arg0: i32, %arg1: memref<1xi32, #tpu.memory_space<smem>>) -> (i32, i32) {
    %c0_i32 = arith.constant 0 : i32
    %c0_i32_0 = arith.constant 0 : i32
    %c0_i32_1 = arith.constant 0 : i32
    return %c0_i32, %c0_i32_0 : i32, i32
  }
  func.func @transform_1(%arg0: i32, %arg1: memref<1xi32, #tpu.memory_space<smem>>) -> (i32, i32) {
    %c0_i32 = arith.constant 0 : i32
    %c0_i32_0 = arith.constant 0 : i32
    return %c0_i32, %arg0 : i32, i32
  }
  func.func @transform_2(%arg0: i32, %arg1: memref<1xi32, #tpu.memory_space<smem>>) -> (i32, i32) {
    %c0_i32 = arith.constant 0 : i32
    %c0_i32_0 = arith.constant 0 : i32
    return %c0_i32, %arg0 : i32, i32
  }
}

</mosaic_0001>

<llo_original>
// kernel: _lambda_.2
$region0: #{_lambda_.2}
  #allocation0 [shape = 'u32[]', space=smem, size = 0x4, offset = 0x4, fixed_abs, tag = 'smem constant byte address 0x4 - core index']
  #allocation1 [shape = 'u32[144,128]{1,0:T(1,128)}', space=vmem, size = 0x12000, scoped, tag = 'internal scratch']
  #allocation2 [shape = 's32[1]{0}', space=sflag, size = 0x4, scoped, tag = 'scoped memory for _lambda_.2']
  #allocation3 [shape = 's32[1]{0:T(128)S(6)}', space=smem, size = 0x200, scoped, tag = 'prefetched SMEM operand 0']
  #allocation4 [shape = 'u8[512]{0}', space=smem, size = 0x200, scoped, tag = 'prefetched SMEM operand 1']
  %s0 = inlined_call_operand.<no memory space> [shape: s32[1], index: 0, kind: input, shape index: {}]
  %s1 = inlined_call_operand.vmem [shape: s32[4], index: 1, kind: input, shape index: {}]
  %s2 = inlined_call_operand.vmem [shape: f32[4,12,128], index: 2, kind: input, shape index: {}]
  %s3 = inlined_call_operand.vmem [shape: f32[4,12,128], index: 3, kind: output, shape index: {}]
  %s4 = sld [smem:[#allocation0]]
  $region21: #{_lambda_.2} parent=0
    _
  %s6 = ssub.s32 1, %s4
  %s7 = scalar_select 0, %s6, %s4
  %8 = sst [smem:[#allocation3]] %s0
  %s9 = sshll.u32 %s1, 4
  %s10 = int_to_ptr.vmem [resolvable:$true] %s9
  %12 = dma.vmem_to_smem %s10, 16, [#allocation4], [#allocation2]
  %13 = dma.done [#allocation2], 16
  %14 = sfence
  // Predicated region
  $region2: #{_lambda_.2} parent=0 // pred_check
    _
  $region3: #{_lambda_.2} parent=0 // pred_check_branch
    %16 = sbr.rel (0) target = $region5
  $region4: #{_lambda_.2} parent=0 // pred_region
    _
  $region5: #{_lambda_.2} parent=0 // pred_fallthru
    _
  %s17 = sld [smem:[#allocation3]]
  loop: start=0, step=1, limit=4
  $region6: #{_lambda_.2} parent=0 // loop_pre_header
    _
  $region7: #{_lambda_.2} parent=0 // loop_header
    %s19 = sphi 0, %s23
    %p20 = scmp.ge.s32.totalorder %s19, 4
  $region8: #{_lambda_.2} parent=0 // loop_header_branch
    %22 = sbr.rel (%p20) target = $region12
  $region9: #{_lambda_.2} parent=0 // loop_body
    %s24 = ssub.s32 4, %s17
    %s25 = sadd.s32 %s19, %s24
    %p26 = scmp.lt.s32.totalorder %s25, 0
    %s27 = ssub.s32 0, %s25
    %s28 = scalar_select %p26, %s27, %s25
    %s29 = sand.u32 %s28, 3
    %s30 = ssub.s32 0, %s29
    %s31 = scalar_select %p26, %s30, %s29
    %p32 = scmp.ne.s32.totalorder %s31, 0
    %p33 = scmp.lt.s32.totalorder %s31, 0
    %p34 = pnand %p33, %p32
    %p35 = pneg %p34
    %s36 = sadd.s32 %s31, 4
    %s37 = scalar_select %p35, %s36, %s31
    %s38 = sld [smem:[#allocation4 + %s19]]
    %s39 = scvt.s32.f32 %s38
    %s40 = smul.u32 %s19, 16
    %s41 = scalar_lea.vmem %s2, %s40
    %v42 = vld [vmem:[%s41] sm:$0xff]
    %v43 = vld [vmem:[%s41 + $0x8] sm:$0xf]
    %s44 = smul.u32 %s37, 16
    %s45 = scalar_lea.vmem %s2, %s44
    %v46 = vld [vmem:[%s45] sm:$0xff]
    %v47 = vld [vmem:[%s45 + $0x8] sm:$0xf]
    %v48 = vstv %s39
    %v49 = vmul.f32 %v48, %v46
    %v50 = vmul.f32 %v48, %v47
    %v51 = vadd.f32 %v42, %v49
    %v52 = vadd.f32 %v43, %v50
    %s53 = scalar_lea.vmem %s3, %s40
    %54 = vst [vmem:[%s53] sm:$0xff] %v51
    %55 = vst [vmem:[%s53 + $0x8] sm:$0xf] %v52
  $region10: #{_lambda_.2} parent=0 // loop_footer
    %s23 = sadd.s32 1, %s19
  $region11: #{_lambda_.2} parent=0 // loop_footer_branch
    %18 = sbr.rel target = $region7
  $region12: #{_lambda_.2} parent=0 // loop_exit
    _
  // Predicated region
  $region13: #{_lambda_.2} parent=0 // pred_check
    _
  $region14: #{_lambda_.2} parent=0 // pred_check_branch
    %57 = sbr.rel (0) target = $region16
  $region15: #{_lambda_.2} parent=0 // pred_region
    _
  $region16: #{_lambda_.2} parent=0 // pred_fallthru
    _
  // Predicated region
  $region17: #{_lambda_.2} parent=0 // pred_check
    _
  $region18: #{_lambda_.2} parent=0 // pred_check_branch
    %59 = sbr.rel (0) target = $region20
  $region19: #{_lambda_.2} parent=0 // pred_region
    _
  $region20: #{_lambda_.2} parent=0 // pred_fallthru
    _

// kernel: _lambda_.3
$region0: #{_lambda_.3}
  #allocation0 [shape = 'u32[]', space=smem, size = 0x4, offset = 0x4, fixed_abs, tag = 'smem constant byte address 0x4 - core index']
  #allocation1 [shape = 'u32[144,128]{1,0:T(1,128)}', space=vmem, size = 0x12000, scoped, tag = 'internal scratch']
  #allocation2 [shape = 'f32[8,128]{1,0:T(8,128)}', space=vmem, size = 0x1000, scoped, tag = 'scratch operand']
  #allocation3 [shape = 's32[1]{0}', space=sflag, size = 0x4, scoped, tag = 'scoped memory for _lambda_.3']
  #allocation4 [shape = 's32[1]{0:T(128)S(6)}', space=smem, size = 0x200, scoped, tag = 'prefetched SMEM operand 0']
  %s0 = inlined_call_operand.<no memory space> [shape: s32[1], index: 0, kind: input, shape index: {}]
  %s1 = inlined_call_operand.vmem [shape: f32[4,1], index: 1, kind: input, shape index: {}]
  %s2 = inlined_call_operand.vmem [shape: f32[4,128], index: 2, kind: input, shape index: {}]
  %s3 = inlined_call_operand.hbm [shape: f32[4,128], index: 3, kind: output, shape index: {}]
  %s4 = sld [smem:[#allocation0]]
  $region18: #{_lambda_.3} parent=0
    _
  %s6 = ssub.s32 1, %s4
  %s7 = scalar_select 0, %s6, %s4
  %8 = sst [smem:[#allocation4]] %s0
  $region1: #{_lambda_.3} parent=0
    #allocation5 [shape = 'u8[2048]{0}', space=vmem, size = 0x800, scoped, tag = 'output window, operand 0, single buffered']
    #allocation6 [shape = 's32[1]{0}', space=sflag, size = 0x4, scoped, tag = 'scoped memory for _lambda_.3']
    %9 = vsyncpa [#allocation6], 0
    // Predicated region
    $region2: #{_lambda_.3} parent=1 // pred_check
      _
    $region3: #{_lambda_.3} parent=1 // pred_check_branch
      %11 = sbr.rel (0) target = $region5
    $region4: #{_lambda_.3} parent=1 // pred_region
      _
    $region5: #{_lambda_.3} parent=1 // pred_fallthru
      _
    // Predicated region
    $region6: #{_lambda_.3} parent=1 // pred_check
      _
    $region7: #{_lambda_.3} parent=1 // pred_check_branch
      %13 = sbr.rel (0) target = $region9
    $region8: #{_lambda_.3} parent=1 // pred_region
      _
    $region9: #{_lambda_.3} parent=1 // pred_fallthru
      _
    %v14 = vld [vmem:[%s2] sm:$0xf]
    %15 = vst [vmem:[#allocation2] sm:$0xf] %v14
    %16 = vst [vmem:[#allocation2 + $0x4] sm:$0xf] %v14
    %s17 = sld [smem:[#allocation4]]
    %s18 = ssub.s32 4, %s17
    %s19 = scalar_lea.vmem [#allocation2], %s18
    %v20 = vld [vmem:[%s19] sm:$0xf]
    %v21 = vld [vmem:[%s1] sm:$0xf]
    %v22 = vsub.f32 1.0, %v14
    %24 = vset.pattern.permute.xlu0 0
    %25 = vperm.xlu0 %24, %v21
    %v26 = vpop.permute.xlu0 %25
    %v28 = vmul.f32 %v26, %v22
    %v29 = vmul.f32 %v28, %v20
    %v30 = vadd.f32 %v14, %v29
    %31 = vst [vmem:[#allocation5] sm:$0xf] %v30
    // Predicated region
    $region10: #{_lambda_.3} parent=1 // pred_check
      _
    $region11: #{_lambda_.3} parent=1 // pred_check_branch
      %33 = sbr.rel (0) target = $region13
    $region12: #{_lambda_.3} parent=1 // pred_region
      %s35 = ssub.s32 64, 64
      %36 = vsyncadd [#allocation6], %s35
      %s38 = sshll.u32 [#allocation5], 4
      %s39 = int_to_ptr.vmem [resolvable:$true] %s38
      %41 = dma.vmem_to_hbm [thread:$0]  %s39, 64, %s3, [#allocation6]
    $region13: #{_lambda_.3} parent=1 // pred_fallthru
      _
    // Predicated region
    $region14: #{_lambda_.3} parent=1 // pred_check
      _
    $region15: #{_lambda_.3} parent=1 // pred_check_branch
      %43 = sbr.rel (0) target = $region17
    $region16: #{_lambda_.3} parent=1 // pred_region
      %44 = dma.done [#allocation6], 64
    $region17: #{_lambda_.3} parent=1 // pred_fallthru
      _
    %45 = vsyncpa [#allocation6], 1

</llo_original>
